<compile_context>
chip_gen: v5e
topology: v5e:2x2
jax: 0.10.0
libtpu: 0.0.40
codegen_flags: <defaults>
</compile_context>

<pallas_src>
import jax
import jax.numpy as jnp
from jax.experimental import pallas as pl
from jax.experimental.pallas import tpu as pltpu

LATENT_DIM = 100          # PyTorch spec
HIDDEN1 = 128
HIDDEN2 = 256
OUTPUT_DIM = 784          # e.g. 28*28 image generator
BATCH = 2

# Lane-aligned padded sizes used inside the kernel path.
LATENT_PAD = 128          # 100 -> 128 : full 128-lane contraction tile for layer 1
OUTPUT_PAD = 896          # 784 -> 896 : 7 x 128 lanes, unmasked output stores


def _round_up(x, m):
    return (x + m - 1) // m * m


def generator_mlp_kernel(z_ref, w1_ref, b1_ref, w2_ref, b2_ref, w3_ref, b3_ref,
                         out_ref):
    """One batch tile of Linear->ReLU->Linear->ReLU->Linear.

    Inputs/weights are bf16 (MXU-native, half HBM bytes); accumulation, bias-add
    and ReLU run in f32 (v5e has no bf16 VPU).
    """
    # Layer 1: (tb, 128) @ (128, 128) -> f32 accumulate
    h1 = jnp.dot(z_ref[...], w1_ref[...], preferred_element_type=jnp.float32)
    h1 = jnp.maximum(h1 + b1_ref[...], 0.0)

    # Layer 2: (tb, 128) @ (128, 256)
    h2 = jnp.dot(h1.astype(jnp.bfloat16), w2_ref[...],
                 preferred_element_type=jnp.float32)
    h2 = jnp.maximum(h2 + b2_ref[...], 0.0)

    # Layer 3: (tb, 256) @ (256, 896), no activation
    out = jnp.dot(h2.astype(jnp.bfloat16), w3_ref[...],
                  preferred_element_type=jnp.float32)
    out_ref[...] = (out + b3_ref[...]).astype(out_ref.dtype)


def init_params(key, latent_dim, output_dim):
    # Deterministic synthetic init mirroring nn.Linear shapes; weights stored
    # (in, out) so the hot path is `x @ W + b` (== PyTorch's x @ W.T + b).
    k1, k2, k3, k4, k5, k6 = jax.random.split(key, 6)
    s1 = 1.0 / jnp.sqrt(latent_dim)
    s2 = 1.0 / jnp.sqrt(HIDDEN1)
    s3 = 1.0 / jnp.sqrt(HIDDEN2)
    w1 = jax.random.uniform(k1, (latent_dim, HIDDEN1), jnp.float32, -s1, s1)
    b1 = jax.random.uniform(k2, (1, HIDDEN1), jnp.float32, -s1, s1)
    w2 = jax.random.uniform(k3, (HIDDEN1, HIDDEN2), jnp.float32, -s2, s2)
    b2 = jax.random.uniform(k4, (1, HIDDEN2), jnp.float32, -s2, s2)
    w3 = jax.random.uniform(k5, (HIDDEN2, output_dim), jnp.float32, -s3, s3)
    b3 = jax.random.uniform(k6, (1, output_dim), jnp.float32, -s3, s3)
    return (w1, b1, w2, b2, w3, b3)


def prepare_params(params):
    """Zero-pad to lane-aligned shapes; cast weights to bf16 (biases stay f32)."""
    w1, b1, w2, b2, w3, b3 = params
    w1p = jnp.zeros((LATENT_PAD, HIDDEN1), jnp.float32).at[: w1.shape[0]].set(w1)
    w3p = jnp.zeros((HIDDEN2, OUTPUT_PAD), jnp.float32).at[:, : w3.shape[1]].set(w3)
    b3p = jnp.zeros((1, OUTPUT_PAD), jnp.float32).at[:, : b3.shape[1]].set(b3)
    return (w1p.astype(jnp.bfloat16), b1,
            w2.astype(jnp.bfloat16), b2,
            w3p.astype(jnp.bfloat16), b3p)


def generator_forward(z, prepared_params, *, batch_tile=128):
    w1, b1, w2, b2, w3, b3 = prepared_params
    B, latent = z.shape

    # Pad batch to a sublane-aligned tile, latent dim to a full 128-lane tile.
    tb = min(batch_tile, _round_up(B, 8))
    b_pad = _round_up(B, tb)
    z_pad = jnp.zeros((b_pad, LATENT_PAD), jnp.float32)
    z_pad = z_pad.at[:B, :latent].set(z).astype(jnp.bfloat16)

    grid = (b_pad // tb,)

    # Constant index_map -> weights/biases stay VMEM-resident across batch tiles.
    const = lambda shape: pl.BlockSpec(shape, lambda i: (0, 0))

    flops = 2 * b_pad * (LATENT_PAD * HIDDEN1
                         + HIDDEN1 * HIDDEN2
                         + HIDDEN2 * OUTPUT_PAD)
    bytes_accessed = (z_pad.size * 2                       # bf16 activations in
                      + (w1.size + w2.size + w3.size) * 2  # bf16 weights
                      + (b1.size + b2.size + b3.size) * 4  # f32 biases
                      + b_pad * OUTPUT_PAD * 4)            # f32 output

    out = pl.pallas_call(
        generator_mlp_kernel,
        out_shape=jax.ShapeDtypeStruct((b_pad, OUTPUT_PAD), jnp.float32),
        grid=grid,
        in_specs=[
            pl.BlockSpec((tb, LATENT_PAD), lambda i: (i, 0)),   # z batch tile
            const((LATENT_PAD, HIDDEN1)),                       # w1
            const((1, HIDDEN1)),                                # b1
            const((HIDDEN1, HIDDEN2)),                          # w2
            const((1, HIDDEN2)),                                # b2
            const((HIDDEN2, OUTPUT_PAD)),                       # w3
            const((1, OUTPUT_PAD)),                             # b3
        ],
        out_specs=pl.BlockSpec((tb, OUTPUT_PAD), lambda i: (i, 0)),
        compiler_params=pltpu.CompilerParams(
            dimension_semantics=("parallel",)),   # v7x: 2 TCs split batch tiles
        cost_estimate=pl.CostEstimate(
            flops=flops, transcendentals=0, bytes_accessed=bytes_accessed),
    )(z_pad, w1, b1, w2, b2, w3, b3)

    # Slice away the batch + lane padding.
    return out[:B, :OUTPUT_DIM]


def reference_forward(z, params):
    w1, b1, w2, b2, w3, b3 = params
    h1 = jnp.maximum(z @ w1 + b1, 0.0)
    h2 = jnp.maximum(h1 @ w2 + b2, 0.0)
    return h2 @ w3 + b3


if __name__ == "__main__":
    key = jax.random.PRNGKey(0)
    k_z, k_p = jax.random.split(key)
    z = jax.random.normal(k_z, (BATCH, LATENT_DIM), jnp.float32)
    params = init_params(k_p, LATENT_DIM, OUTPUT_DIM)
    prepared = prepare_params(params)

    out = generator_forward(z, prepared)
    out = jax.block_until_ready(out)

    ref = reference_forward(z, params)
    assert out.shape == (BATCH, OUTPUT_DIM), out.shape
    # bf16 weights + bf16 inter-layer activations -> loosened tolerance vs f32 ref.
    assert jnp.allclose(out, ref, atol=2e-2, rtol=2e-2), "mismatch vs reference"

    print("KERNEL_OK")
</pallas_src>

<mosaic_0001>
module attributes {stable_mosaic.version = 11 : i64} {
  func.func @generator_mlp_kernel(%arg0: i32, %arg1: memref<8x128xbf16, #tpu.memory_space<vmem>>, %arg2: memref<128x128xbf16, #tpu.memory_space<vmem>>, %arg3: memref<1x128xf32, #tpu.memory_space<vmem>>, %arg4: memref<128x256xbf16, #tpu.memory_space<vmem>>, %arg5: memref<1x256xf32, #tpu.memory_space<vmem>>, %arg6: memref<256x896xbf16, #tpu.memory_space<vmem>>, %arg7: memref<1x896xf32, #tpu.memory_space<vmem>>, %arg8: memref<8x896xf32, #tpu.memory_space<vmem>>) attributes {dimension_semantics = [#tpu.dimension_semantics<parallel>], iteration_bounds = array<i64: 1>, scalar_prefetch = 0 : i64, scratch_operands = 0 : i64, tpu.core_type = #tpu.core_type<tc>, window_params = [{transform_indices = @transform_0, window_bounds = array<i64: 8, 128>}, {pipeline_mode = #tpu.pipeline_mode<synchronous>, transform_indices = @transform_1, window_bounds = array<i64: 128, 128>}, {pipeline_mode = #tpu.pipeline_mode<synchronous>, transform_indices = @transform_2, window_bounds = array<i64: 1, 128>}, {pipeline_mode = #tpu.pipeline_mode<synchronous>, transform_indices = @transform_3, window_bounds = array<i64: 128, 256>}, {pipeline_mode = #tpu.pipeline_mode<synchronous>, transform_indices = @transform_4, window_bounds = array<i64: 1, 256>}, {pipeline_mode = #tpu.pipeline_mode<synchronous>, transform_indices = @transform_5, window_bounds = array<i64: 256, 896>}, {pipeline_mode = #tpu.pipeline_mode<synchronous>, transform_indices = @transform_6, window_bounds = array<i64: 1, 896>}, {transform_indices = @transform_7, window_bounds = array<i64: 8, 896>}]} {
    %c0 = arith.constant 0 : index
    %c0_0 = arith.constant 0 : index
    %0 = vector.load %arg1[%c0, %c0_0] : memref<8x128xbf16, #tpu.memory_space<vmem>>, vector<8x128xbf16>
    %c0_1 = arith.constant 0 : index
    %c0_2 = arith.constant 0 : index
    %1 = vector.load %arg2[%c0_1, %c0_2] : memref<128x128xbf16, #tpu.memory_space<vmem>>, vector<128x128xbf16>
    %cst = arith.constant dense<0.000000e+00> : vector<8x128xf32>
    %2 = tpu.matmul %0, %1, %cst {dimension_numbers = #tpu.dot_dimension_numbers<[1], [0], [0], [1], [0, 0, 1, 1], [], []>} : vector<8x128xbf16>, vector<128x128xbf16>, vector<8x128xf32> -> vector<8x128xf32>
    %c0_3 = arith.constant 0 : index
    %c0_4 = arith.constant 0 : index
    %3 = vector.load %arg3[%c0_3, %c0_4] : memref<1x128xf32, #tpu.memory_space<vmem>>, vector<1x128xf32>
    %4 = vector.broadcast %3 : vector<1x128xf32> to vector<8x128xf32>
    %5 = arith.addf %2, %4 : vector<8x128xf32>
    %cst_5 = arith.constant 0.000000e+00 : f32
    %6 = vector.broadcast %cst_5 : f32 to vector<8x128xf32>
    %7 = arith.maximumf %5, %6 : vector<8x128xf32>
    %8 = arith.truncf %7 : vector<8x128xf32> to vector<8x128xbf16>
    %c0_6 = arith.constant 0 : index
    %c0_7 = arith.constant 0 : index
    %9 = vector.load %arg4[%c0_6, %c0_7] : memref<128x256xbf16, #tpu.memory_space<vmem>>, vector<128x256xbf16>
    %cst_8 = arith.constant dense<0.000000e+00> : vector<8x256xf32>
    %10 = tpu.matmul %8, %9, %cst_8 {dimension_numbers = #tpu.dot_dimension_numbers<[1], [0], [0], [1], [0, 0, 1, 1], [], []>} : vector<8x128xbf16>, vector<128x256xbf16>, vector<8x256xf32> -> vector<8x256xf32>
    %c0_9 = arith.constant 0 : index
    %c0_10 = arith.constant 0 : index
    %11 = vector.load %arg5[%c0_9, %c0_10] : memref<1x256xf32, #tpu.memory_space<vmem>>, vector<1x256xf32>
    %12 = vector.broadcast %11 : vector<1x256xf32> to vector<8x256xf32>
    %13 = arith.addf %10, %12 : vector<8x256xf32>
    %cst_11 = arith.constant 0.000000e+00 : f32
    %14 = vector.broadcast %cst_11 : f32 to vector<8x256xf32>
    %15 = arith.maximumf %13, %14 : vector<8x256xf32>
    %16 = arith.truncf %15 : vector<8x256xf32> to vector<8x256xbf16>
    %c0_12 = arith.constant 0 : index
    %c0_13 = arith.constant 0 : index
    %17 = vector.load %arg6[%c0_12, %c0_13] : memref<256x896xbf16, #tpu.memory_space<vmem>>, vector<256x896xbf16>
    %cst_14 = arith.constant dense<0.000000e+00> : vector<8x896xf32>
    %18 = tpu.matmul %16, %17, %cst_14 {dimension_numbers = #tpu.dot_dimension_numbers<[1], [0], [0], [1], [0, 0, 1, 1], [], []>} : vector<8x256xbf16>, vector<256x896xbf16>, vector<8x896xf32> -> vector<8x896xf32>
    %c0_15 = arith.constant 0 : index
    %c0_16 = arith.constant 0 : index
    %19 = vector.load %arg7[%c0_15, %c0_16] : memref<1x896xf32, #tpu.memory_space<vmem>>, vector<1x896xf32>
    %20 = vector.broadcast %19 : vector<1x896xf32> to vector<8x896xf32>
    %21 = arith.addf %18, %20 : vector<8x896xf32>
    %c0_17 = arith.constant 0 : index
    %c0_18 = arith.constant 0 : index
    %22 = vector.load %arg8[%c0_17, %c0_18] : memref<8x896xf32, #tpu.memory_space<vmem>>, vector<8x896xf32>
    tpu.vector_store %arg8[%c0_17, %c0_18], %21 {strides = array<i32>} : memref<8x896xf32, #tpu.memory_space<vmem>>, vector<8x896xf32>,
    return
  }
  func.func @transform_0(%arg0: i32) -> (i32, i32) {
    %c0_i32 = arith.constant 0 : i32
    %c0_i32_0 = arith.constant 0 : i32
    return %arg0, %c0_i32 : i32, i32
  }
  func.func @transform_1(%arg0: i32) -> (i32, i32) {
    %c0_i32 = arith.constant 0 : i32
    %c0_i32_0 = arith.constant 0 : i32
    %c0_i32_1 = arith.constant 0 : i32
    return %c0_i32, %c0_i32_0 : i32, i32
  }
  func.func @transform_2(%arg0: i32) -> (i32, i32) {
    %c0_i32 = arith.constant 0 : i32
    %c0_i32_0 = arith.constant 0 : i32
    %c0_i32_1 = arith.constant 0 : i32
    return %c0_i32, %c0_i32_0 : i32, i32
  }
  func.func @transform_3(%arg0: i32) -> (i32, i32) {
    %c0_i32 = arith.constant 0 : i32
    %c0_i32_0 = arith.constant 0 : i32
    %c0_i32_1 = arith.constant 0 : i32
    return %c0_i32, %c0_i32_0 : i32, i32
  }
  func.func @transform_4(%arg0: i32) -> (i32, i32) {
    %c0_i32 = arith.constant 0 : i32
    %c0_i32_0 = arith.constant 0 : i32
    %c0_i32_1 = arith.constant 0 : i32
    return %c0_i32, %c0_i32_0 : i32, i32
  }
  func.func @transform_5(%arg0: i32) -> (i32, i32) {
    %c0_i32 = arith.constant 0 : i32
    %c0_i32_0 = arith.constant 0 : i32
    %c0_i32_1 = arith.constant 0 : i32
    return %c0_i32, %c0_i32_0 : i32, i32
  }
  func.func @transform_6(%arg0: i32) -> (i32, i32) {
    %c0_i32 = arith.constant 0 : i32
    %c0_i32_0 = arith.constant 0 : i32
    %c0_i32_1 = arith.constant 0 : i32
    return %c0_i32, %c0_i32_0 : i32, i32
  }
  func.func @transform_7(%arg0: i32) -> (i32, i32) {
    %c0_i32 = arith.constant 0 : i32
    %c0_i32_0 = arith.constant 0 : i32
    return %arg0, %c0_i32 : i32, i32
  }
}

</mosaic_0001>

<llo_original>
// kernel: tpu_custom_call.1
$region0: #{tpu_custom_call.1}
  #allocation0 [shape = 'u32[]', space=smem, size = 0x4, offset = 0x4, fixed_abs, tag = 'smem constant byte address 0x4 - core index']
  #allocation1 [shape = 'u32[72,128]{1,0:T(1,128)}', space=vmem, size = 0x9000, scoped, tag = 'internal scratch']
  %s0 = inlined_call_operand.hbm [shape: bf16[8,128], index: 0, kind: input, shape index: {}]
  %s1 = inlined_call_operand.hbm [shape: bf16[128,128], index: 1, kind: input, shape index: {}]
  %s2 = inlined_call_operand.vmem [shape: f32[1,128], index: 2, kind: input, shape index: {}]
  %s3 = inlined_call_operand.hbm [shape: bf16[128,256], index: 3, kind: input, shape index: {}]
  %s4 = inlined_call_operand.vmem [shape: f32[1,256], index: 4, kind: input, shape index: {}]
  %s5 = inlined_call_operand.hbm [shape: bf16[256,896], index: 5, kind: input, shape index: {}]
  %s6 = inlined_call_operand.hbm [shape: f32[1,896], index: 6, kind: input, shape index: {}]
  %s7 = inlined_call_operand.hbm [shape: f32[8,896], index: 7, kind: output, shape index: {}]
  %s8 = sld [smem:[#allocation0]]
  $region58: #{tpu_custom_call.1} parent=0
    _
  %s10 = ssub.s32 1, %s8
  %s11 = scalar_select 0, %s10, %s8
  $region1: #{tpu_custom_call.1} parent=0
    #allocation2 [shape = 'u8[2048]{0}', space=vmem, size = 0x800, scoped, tag = 'input window, operand 0, single buffered']
    #allocation3 [shape = 's32[1]{0}', space=sflag, size = 0x4, scoped, tag = 'scoped memory for tpu_custom_call.1']
    #allocation4 [shape = 's32[1]{0}', space=sflag, size = 0x4, scoped, tag = 'scoped memory for tpu_custom_call.1']
    #allocation5 [shape = 'u8[32768]{0}', space=vmem, size = 0x8000, scoped, tag = 'input window, operand 1, single buffered']
    #allocation6 [shape = 's32[1]{0}', space=sflag, size = 0x4, scoped, tag = 'scoped memory for tpu_custom_call.1']
    #allocation7 [shape = 'u8[65536]{0}', space=vmem, size = 0x10000, scoped, tag = 'input window, operand 3, single buffered']
    #allocation8 [shape = 'u8[458752]{0}', space=vmem, size = 0x70000, scoped, tag = 'input window, operand 5, single buffered']
    #allocation9 [shape = 's32[1]{0}', space=sflag, size = 0x4, scoped, tag = 'scoped memory for tpu_custom_call.1']
    #allocation10 [shape = 'u8[3584]{0}', space=vmem, size = 0x1000, scoped, tag = 'input window, operand 6, single buffered']
    #allocation11 [shape = 'u8[28672]{0}', space=vmem, size = 0x7000, scoped, tag = 'output window, operand 0, single buffered']
    %12 = vsyncpa [#allocation3], 0
    %13 = vsyncpa [#allocation6], 0
    %14 = vsyncpa [#allocation9], 0
    %15 = vsyncpa [#allocation4], 0
    // Predicated region
    $region2: #{tpu_custom_call.1} parent=1 // pred_check
      _
    $region3: #{tpu_custom_call.1} parent=1 // pred_check_branch
      %17 = sbr.rel (0) target = $region5
    $region4: #{tpu_custom_call.1} parent=1 // pred_region
      %19 = vsyncadd [#allocation3], 0
      %s21 = sshll.u32 %s0, 4
      %s22 = int_to_ptr.hbm [resolvable:$true] %s21
      %s23 = sshll.u32 [#allocation2], 4
      %s24 = int_to_ptr.vmem [resolvable:$true] %s23
      %26 = dma.hbm_to_vmem [thread:$0]  %s22, 64, %s24, [#allocation3]
    $region5: #{tpu_custom_call.1} parent=1 // pred_fallthru
      _
    // Predicated region
    $region6: #{tpu_custom_call.1} parent=1 // pred_check
      _
    $region7: #{tpu_custom_call.1} parent=1 // pred_check_branch
      %28 = sbr.rel (0) target = $region9
    $region8: #{tpu_custom_call.1} parent=1 // pred_region
      %30 = vsyncadd [#allocation6], 0
      %s31 = sshll.u32 %s1, 4
      %s32 = int_to_ptr.hbm [resolvable:$true] %s31
      %s33 = sshll.u32 [#allocation5], 4
      %s34 = int_to_ptr.vmem [resolvable:$true] %s33
      %39 = dma.hbm_to_vmem [thread:$0]  %s32, 1024, %s34, [#allocation6], 64, 64, 4
    $region9: #{tpu_custom_call.1} parent=1 // pred_fallthru
      _
    // Predicated region
    $region10: #{tpu_custom_call.1} parent=1 // pred_check
      _
    $region11: #{tpu_custom_call.1} parent=1 // pred_check_branch
      %41 = sbr.rel (0) target = $region13
    $region12: #{tpu_custom_call.1} parent=1 // pred_region
      _
    $region13: #{tpu_custom_call.1} parent=1 // pred_fallthru
      _
    // Predicated region
    $region14: #{tpu_custom_call.1} parent=1 // pred_check
      _
    $region15: #{tpu_custom_call.1} parent=1 // pred_check_branch
      %43 = sbr.rel (0) target = $region17
    $region16: #{tpu_custom_call.1} parent=1 // pred_region
      %45 = vsyncadd [#allocation6], 0
      %s46 = sshll.u32 %s3, 4
      %s47 = int_to_ptr.hbm [resolvable:$true] %s46
      %s48 = sshll.u32 [#allocation7], 4
      %s49 = int_to_ptr.vmem [resolvable:$true] %s48
      %54 = dma.hbm_to_vmem [thread:$0]  %s47, 2048, %s49, [#allocation6], 128, 128, 8
    $region17: #{tpu_custom_call.1} parent=1 // pred_fallthru
      _
    // Predicated region
    $region18: #{tpu_custom_call.1} parent=1 // pred_check
      _
    $region19: #{tpu_custom_call.1} parent=1 // pred_check_branch
      %56 = sbr.rel (0) target = $region21
    $region20: #{tpu_custom_call.1} parent=1 // pred_region
      _
    $region21: #{tpu_custom_call.1} parent=1 // pred_fallthru
      _
    // Predicated region
    $region22: #{tpu_custom_call.1} parent=1 // pred_check
      _
    $region23: #{tpu_custom_call.1} parent=1 // pred_check_branch
      %58 = sbr.rel (0) target = $region25
    $region24: #{tpu_custom_call.1} parent=1 // pred_region
      %60 = vsyncadd [#allocation9], 0
      %s61 = sshll.u32 %s5, 4
      %s62 = int_to_ptr.hbm [resolvable:$true] %s61
      %s63 = sshll.u32 [#allocation8], 4
      %s64 = int_to_ptr.vmem [resolvable:$true] %s63
      %69 = dma.hbm_to_vmem [thread:$0]  %s62, 14336, %s64, [#allocation9], 448, 448, 28
    $region25: #{tpu_custom_call.1} parent=1 // pred_fallthru
      _
    // Predicated region
    $region26: #{tpu_custom_call.1} parent=1 // pred_check
      _
    $region27: #{tpu_custom_call.1} parent=1 // pred_check_branch
      %71 = sbr.rel (0) target = $region29
    $region28: #{tpu_custom_call.1} parent=1 // pred_region
      %73 = vsyncadd [#allocation9], 0
      %s75 = sshll.u32 %s6, 4
      %s76 = int_to_ptr.hbm [resolvable:$true] %s75
      %s77 = sshll.u32 [#allocation10], 4
      %s78 = int_to_ptr.vmem [resolvable:$true] %s77
      %80 = dma.hbm_to_vmem [thread:$0]  %s76, 112, %s78, [#allocation9]
    $region29: #{tpu_custom_call.1} parent=1 // pred_fallthru
      _
    // Predicated region
    $region30: #{tpu_custom_call.1} parent=1 // pred_check
      _
    $region31: #{tpu_custom_call.1} parent=1 // pred_check_branch
      %82 = sbr.rel (0) target = $region33
    $region32: #{tpu_custom_call.1} parent=1 // pred_region
      %84 = dma.done [#allocation3], 64
    $region33: #{tpu_custom_call.1} parent=1 // pred_fallthru
      _
    // Predicated region
    $region34: #{tpu_custom_call.1} parent=1 // pred_check
      _
    $region35: #{tpu_custom_call.1} parent=1 // pred_check_branch
      %86 = sbr.rel (0) target = $region37
    $region36: #{tpu_custom_call.1} parent=1 // pred_region
      %88 = dma.done [#allocation6], 1024
    $region37: #{tpu_custom_call.1} parent=1 // pred_fallthru
      _
    // Predicated region
    $region38: #{tpu_custom_call.1} parent=1 // pred_check
      _
    $region39: #{tpu_custom_call.1} parent=1 // pred_check_branch
      %90 = sbr.rel (0) target = $region41
    $region40: #{tpu_custom_call.1} parent=1 // pred_region
      %92 = dma.done [#allocation6], 2048
    $region41: #{tpu_custom_call.1} parent=1 // pred_fallthru
      _
    // Predicated region
    $region42: #{tpu_custom_call.1} parent=1 // pred_check
      _
    $region43: #{tpu_custom_call.1} parent=1 // pred_check_branch
      %94 = sbr.rel (0) target = $region45
    $region44: #{tpu_custom_call.1} parent=1 // pred_region
      %96 = dma.done [#allocation9], 14336
    $region45: #{tpu_custom_call.1} parent=1 // pred_fallthru
      _
    // Predicated region
    $region46: #{tpu_custom_call.1} parent=1 // pred_check
      _
    $region47: #{tpu_custom_call.1} parent=1 // pred_check_branch
      %98 = sbr.rel (0) target = $region49
    $region48: #{tpu_custom_call.1} parent=1 // pred_region
      %100 = dma.done [#allocation9], 112
    $region49: #{tpu_custom_call.1} parent=1 // pred_fallthru
      _
    %v101 = vld [vmem:[#allocation2] sm:$0xf]
    %v102 = vld [vmem:[#allocation5] sm:$0xf]
    %v103 = vld [vmem:[#allocation5 + $0x4] sm:$0xf]
    %v104 = vld [vmem:[#allocation5 + $0x8] sm:$0xf]
    %v105 = vld [vmem:[#allocation5 + $0xc] sm:$0xf]
    %v106 = vld [vmem:[#allocation5 + $0x10] sm:$0xf]
    %v107 = vld [vmem:[#allocation5 + $0x14] sm:$0xf]
    %v108 = vld [vmem:[#allocation5 + $0x18] sm:$0xf]
    %v109 = vld [vmem:[#allocation5 + $0x1c] sm:$0xf]
    %v110 = vld [vmem:[#allocation5 + $0x20] sm:$0xf]
    %v111 = vld [vmem:[#allocation5 + $0x24] sm:$0xf]
    %v112 = vld [vmem:[#allocation5 + $0x28] sm:$0xf]
    %v113 = vld [vmem:[#allocation5 + $0x2c] sm:$0xf]
    %v114 = vld [vmem:[#allocation5 + $0x30] sm:$0xf]
    %v115 = vld [vmem:[#allocation5 + $0x34] sm:$0xf]
    %v116 = vld [vmem:[#allocation5 + $0x38] sm:$0xf]
    %v117 = vld [vmem:[#allocation5 + $0x3c] sm:$0xf]
    %v118 = vld [vmem:[%s2] sm:$0x1]
    %v120 = vperm.slane %v118, 0
    %v138 = vunpack.c.l.b16 %v102
    %v139 = vunpack.c.l.b16 %v103
    %v140 = vunpack.c.l.b16 %v104
    %v141 = vunpack.c.l.b16 %v105
    %v142 = vunpack.c.l.b16 %v106
    %v143 = vunpack.c.l.b16 %v107
    %v144 = vunpack.c.l.b16 %v108
    %v145 = vunpack.c.l.b16 %v109
    %v146 = vunpack.c.l.b16 %v110
    %v147 = vunpack.c.l.b16 %v111
    %v148 = vunpack.c.l.b16 %v112
    %v149 = vunpack.c.l.b16 %v113
    %v150 = vunpack.c.l.b16 %v114
    %v151 = vunpack.c.l.b16 %v115
    %v152 = vunpack.c.l.b16 %v116
    %v153 = vunpack.c.l.b16 %v117
    %v154 = vpack.c.b16 %v139, %v138
    %v155 = vpack.c.b16 %v141, %v140
    %v156 = vpack.c.b16 %v143, %v142
    %v157 = vpack.c.b16 %v145, %v144
    %v158 = vpack.c.b16 %v147, %v146
    %v159 = vpack.c.b16 %v149, %v148
    %v160 = vpack.c.b16 %v151, %v150
    %v161 = vpack.c.b16 %v153, %v152
    %170 = vmatpush.bf16.msra.mxu0 %v161
    %171 = vmatpush.bf16.msra.mxu0 %v160
    %172 = vmatpush.bf16.msra.mxu0 %v159
    %173 = vmatpush.bf16.msra.mxu0 %v158
    %174 = vmatpush.bf16.msra.mxu0 %v157
    %175 = vmatpush.bf16.msra.mxu0 %v156
    %176 = vmatpush.bf16.msra.mxu0 %v155
    %177 = vmatpush.bf16.msra.mxu0 %v154
    %178 = vmatmul.bf16.gmra.mxu0 %v101
    %v179 = vpop.f32.mrf.mxu0
    %v180 = vadd.f32 %v120, %v179
    %v181 = vpop.f32.mrf.mxu0
    %182 = vdwg.mxu0
    %v183 = vmax.f32 %v180, 0.0
    %v184 = vpack.c.bf16 %v183, %v183
    %v185 = vld [vmem:[#allocation7] sm:$0xff]
    %v186 = vld [vmem:[#allocation7 + $0x8] sm:$0xff]
    %v187 = vld [vmem:[#allocation7 + $0x10] sm:$0xff]
    %v188 = vld [vmem:[#allocation7 + $0x18] sm:$0xff]
    %v189 = vld [vmem:[#allocation7 + $0x20] sm:$0xff]
    %v190 = vld [vmem:[#allocation7 + $0x28] sm:$0xff]
    %v191 = vld [vmem:[#allocation7 + $0x30] sm:$0xff]
    %v192 = vld [vmem:[#allocation7 + $0x38] sm:$0xff]
    %v193 = vld [vmem:[#allocation7 + $0x40] sm:$0xff]
    %v194 = vld [vmem:[#allocation7 + $0x48] sm:$0xff]
    %v195 = vld [vmem:[#allocation7 + $0x50] sm:$0xff]
    %v196 = vld [vmem:[#allocation7 + $0x58] sm:$0xff]
    %v197 = vld [vmem:[#allocation7 + $0x60] sm:$0xff]
    %v198 = vld [vmem:[#allocation7 + $0x68] sm:$0xff]
    %v199 = vld [vmem:[#allocation7 + $0x70] sm:$0xff]
    %v200 = vld [vmem:[#allocation7 + $0x78] sm:$0xff]
    %v201 = vld [vmem:[%s4] sm:$0x3]
    %v203 = vperm.slane %v201, 0
    %v204 = vperm.slane %v201, 1
    %v223 = vunpack.c.l.b16 %v185
    %v224 = vunpack.c.h.b16 %v185
    %v225 = vunpack.c.l.b16 %v186
    %v226 = vunpack.c.h.b16 %v186
    %v227 = vunpack.c.l.b16 %v187
    %v228 = vunpack.c.h.b16 %v187
    %v229 = vunpack.c.l.b16 %v188
    %v230 = vunpack.c.h.b16 %v188
    %v231 = vunpack.c.l.b16 %v189
    %v232 = vunpack.c.h.b16 %v189
    %v233 = vunpack.c.l.b16 %v190
    %v234 = vunpack.c.h.b16 %v190
    %v235 = vunpack.c.l.b16 %v191
    %v236 = vunpack.c.h.b16 %v191
    %v237 = vunpack.c.l.b16 %v192
    %v238 = vunpack.c.h.b16 %v192
    %v239 = vunpack.c.l.b16 %v193
    %v240 = vunpack.c.h.b16 %v193
    %v241 = vunpack.c.l.b16 %v194
    %v242 = vunpack.c.h.b16 %v194
    %v243 = vunpack.c.l.b16 %v195
    %v244 = vunpack.c.h.b16 %v195
    %v245 = vunpack.c.l.b16 %v196
    %v246 = vunpack.c.h.b16 %v196
    %v247 = vunpack.c.l.b16 %v197
    %v248 = vunpack.c.h.b16 %v197
    %v249 = vunpack.c.l.b16 %v198
    %v250 = vunpack.c.h.b16 %v198
    %v251 = vunpack.c.l.b16 %v199
    %v252 = vunpack.c.h.b16 %v199
    %v253 = vunpack.c.l.b16 %v200
    %v254 = vunpack.c.h.b16 %v200
    %v255 = vpack.c.b16 %v225, %v223
    %v256 = vpack.c.b16 %v226, %v224
    %v257 = vpack.c.b16 %v229, %v227
    %v258 = vpack.c.b16 %v230, %v228
    %v259 = vpack.c.b16 %v233, %v231
    %v260 = vpack.c.b16 %v234, %v232
    %v261 = vpack.c.b16 %v237, %v235
    %v262 = vpack.c.b16 %v238, %v236
    %v263 = vpack.c.b16 %v241, %v239
    %v264 = vpack.c.b16 %v242, %v240
    %v265 = vpack.c.b16 %v245, %v243
    %v266 = vpack.c.b16 %v246, %v244
    %v267 = vpack.c.b16 %v249, %v247
    %v268 = vpack.c.b16 %v250, %v248
    %v269 = vpack.c.b16 %v253, %v251
    %v270 = vpack.c.b16 %v254, %v252
    %287 = vmatpush.bf16.msra.mxu0 %v269
    %288 = vmatpush.bf16.msra.mxu0 %v267
    %289 = vmatpush.bf16.msra.mxu0 %v265
    %290 = vmatpush.bf16.msra.mxu0 %v263
    %291 = vmatpush.bf16.msra.mxu0 %v261
    %292 = vmatpush.bf16.msra.mxu0 %v259
    %293 = vmatpush.bf16.msra.mxu0 %v257
    %294 = vmatpush.bf16.msra.mxu0 %v255
    %295 = vmatmul.bf16.gmra.mxu0 %v184
    %v296 = vpop.f32.mrf.mxu0
    %v297 = vadd.f32 %v203, %v296
    %v298 = vpop.f32.mrf.mxu0
    %299 = vdwg.mxu0
    %300 = vmatpush.bf16.msra.mxu0 %v270
    %301 = vmatpush.bf16.msra.mxu0 %v268
    %302 = vmatpush.bf16.msra.mxu0 %v266
    %303 = vmatpush.bf16.msra.mxu0 %v264
    %304 = vmatpush.bf16.msra.mxu0 %v262
    %305 = vmatpush.bf16.msra.mxu0 %v260
    %306 = vmatpush.bf16.msra.mxu0 %v258
    %307 = vmatpush.bf16.msra.mxu0 %v256
    %308 = vmatmul.bf16.gmra.mxu0 %v184
    %v309 = vpop.f32.mrf.mxu0
    %v310 = vadd.f32 %v204, %v309
    %v311 = vpop.f32.mrf.mxu0
    %312 = vdwg.mxu0
    %v313 = vmax.f32 %v297, 0.0
    %v314 = vmax.f32 %v310, 0.0
    %v315 = vpack.c.bf16 %v313, %v313
    %v316 = vpack.c.bf16 %v314, %v314
    %v317 = vld [vmem:[#allocation8] sm:$0xff]
    %v318 = vld [vmem:[#allocation8 + $0x8] sm:$0xff]
    %v319 = vld [vmem:[#allocation8 + $0x10] sm:$0xff]
    %v320 = vld [vmem:[#allocation8 + $0x18] sm:$0xf]
    %v321 = vld [vmem:[#allocation8 + $0x1c] sm:$0xff]
    %v322 = vld [vmem:[#allocation8 + $0x24] sm:$0xff]
    %v323 = vld [vmem:[#allocation8 + $0x2c] sm:$0xff]
    %v324 = vld [vmem:[#allocation8 + $0x34] sm:$0xf]
    %v325 = vld [vmem:[#allocation8 + $0x38] sm:$0xff]
    %v326 = vld [vmem:[#allocation8 + $0x40] sm:$0xff]
    %v327 = vld [vmem:[#allocation8 + $0x48] sm:$0xff]
    %v328 = vld [vmem:[#allocation8 + $0x50] sm:$0xf]
    %v329 = vld [vmem:[#allocation8 + $0x54] sm:$0xff]
    %v330 = vld [vmem:[#allocation8 + $0x5c] sm:$0xff]
    %v331 = vld [vmem:[#allocation8 + $0x64] sm:$0xff]
    %v332 = vld [vmem:[#allocation8 + $0x6c] sm:$0xf]
    %v333 = vld [vmem:[#allocation8 + $0x70] sm:$0xff]
    %v334 = vld [vmem:[#allocation8 + $0x78] sm:$0xff]
    %v335 = vld [vmem:[#allocation8 + $0x80] sm:$0xff]
    %v336 = vld [vmem:[#allocation8 + $0x88] sm:$0xf]
    %v337 = vld [vmem:[#allocation8 + $0x8c] sm:$0xff]
    %v338 = vld [vmem:[#allocation8 + $0x94] sm:$0xff]
    %v339 = vld [vmem:[#allocation8 + $0x9c] sm:$0xff]
    %v340 = vld [vmem:[#allocation8 + $0xa4] sm:$0xf]
    %v341 = vld [vmem:[#allocation8 + $0xa8] sm:$0xff]
    %v342 = vld [vmem:[#allocation8 + $0xb0] sm:$0xff]
    %v343 = vld [vmem:[#allocation8 + $0xb8] sm:$0xff]
    %v344 = vld [vmem:[#allocation8 + $0xc0] sm:$0xf]
    %v345 = vld [vmem:[#allocation8 + $0xc4] sm:$0xff]
    %v346 = vld [vmem:[#allocation8 + $0xcc] sm:$0xff]
    %v347 = vld [vmem:[#allocation8 + $0xd4] sm:$0xff]
    %v348 = vld [vmem:[#allocation8 + $0xdc] sm:$0xf]
    %v349 = vld [vmem:[#allocation8 + $0xe0] sm:$0xff]
    %v350 = vld [vmem:[#allocation8 + $0xe8] sm:$0xff]
    %v351 = vld [vmem:[#allocation8 + $0xf0] sm:$0xff]
    %v352 = vld [vmem:[#allocation8 + $0xf8] sm:$0xf]
    %v353 = vld [vmem:[#allocation8 + $0xfc] sm:$0xff]
    %v354 = vld [vmem:[#allocation8 + $0x104] sm:$0xff]
    %v355 = vld [vmem:[#allocation8 + $0x10c] sm:$0xff]
    %v356 = vld [vmem:[#allocation8 + $0x114] sm:$0xf]
    %v357 = vld [vmem:[#allocation8 + $0x118] sm:$0xff]
    %v358 = vld [vmem:[#allocation8 + $0x120] sm:$0xff]
    %v359 = vld [vmem:[#allocation8 + $0x128] sm:$0xff]
    %v360 = vld [vmem:[#allocation8 + $0x130] sm:$0xf]
    %v361 = vld [vmem:[#allocation8 + $0x134] sm:$0xff]
    %v362 = vld [vmem:[#allocation8 + $0x13c] sm:$0xff]
    %v363 = vld [vmem:[#allocation8 + $0x144] sm:$0xff]
    %v364 = vld [vmem:[#allocation8 + $0x14c] sm:$0xf]
    %v365 = vld [vmem:[#allocation8 + $0x150] sm:$0xff]
    %v366 = vld [vmem:[#allocation8 + $0x158] sm:$0xff]
    %v367 = vld [vmem:[#allocation8 + $0x160] sm:$0xff]
    %v368 = vld [vmem:[#allocation8 + $0x168] sm:$0xf]
    %v369 = vld [vmem:[#allocation8 + $0x16c] sm:$0xff]
    %v370 = vld [vmem:[#allocation8 + $0x174] sm:$0xff]
    %v371 = vld [vmem:[#allocation8 + $0x17c] sm:$0xff]
    %v372 = vld [vmem:[#allocation8 + $0x184] sm:$0xf]
    %v373 = vld [vmem:[#allocation8 + $0x188] sm:$0xff]
    %v374 = vld [vmem:[#allocation8 + $0x190] sm:$0xff]
    %v375 = vld [vmem:[#allocation8 + $0x198] sm:$0xff]
    %v376 = vld [vmem:[#allocation8 + $0x1a0] sm:$0xf]
    %v377 = vld [vmem:[#allocation8 + $0x1a4] sm:$0xff]
    %v378 = vld [vmem:[#allocation8 + $0x1ac] sm:$0xff]
    %v379 = vld [vmem:[#allocation8 + $0x1b4] sm:$0xff]
    %v380 = vld [vmem:[#allocation8 + $0x1bc] sm:$0xf]
    %v381 = vld [vmem:[#allocation8 + $0x1c0] sm:$0xff]
    %v382 = vld [vmem:[#allocation8 + $0x1c8] sm:$0xff]
    %v383 = vld [vmem:[#allocation8 + $0x1d0] sm:$0xff]
    %v384 = vld [vmem:[#allocation8 + $0x1d8] sm:$0xf]
    %v385 = vld [vmem:[#allocation8 + $0x1dc] sm:$0xff]
    %v386 = vld [vmem:[#allocation8 + $0x1e4] sm:$0xff]
    %v387 = vld [vmem:[#allocation8 + $0x1ec] sm:$0xff]
    %v388 = vld [vmem:[#allocation8 + $0x1f4] sm:$0xf]
    %v389 = vld [vmem:[#allocation8 + $0x1f8] sm:$0xff]
    %v390 = vld [vmem:[#allocation8 + $0x200] sm:$0xff]
    %v391 = vld [vmem:[#allocation8 + $0x208] sm:$0xff]
    %v392 = vld [vmem:[#allocation8 + $0x210] sm:$0xf]
    %v393 = vld [vmem:[#allocation8 + $0x214] sm:$0xff]
    %v394 = vld [vmem:[#allocation8 + $0x21c] sm:$0xff]
    %v395 = vld [vmem:[#allocation8 + $0x224] sm:$0xff]
    %v396 = vld [vmem:[#allocation8 + $0x22c] sm:$0xf]
    %v397 = vld [vmem:[#allocation8 + $0x230] sm:$0xff]
    %v398 = vld [vmem:[#allocation8 + $0x238] sm:$0xff]
    %v399 = vld [vmem:[#allocation8 + $0x240] sm:$0xff]
    %v400 = vld [vmem:[#allocation8 + $0x248] sm:$0xf]
    %v401 = vld [vmem:[#allocation8 + $0x24c] sm:$0xff]
    %v402 = vld [vmem:[#allocation8 + $0x254] sm:$0xff]
    %v403 = vld [vmem:[#allocation8 + $0x25c] sm:$0xff]
    %v404 = vld [vmem:[#allocation8 + $0x264] sm:$0xf]
    %v405 = vld [vmem:[#allocation8 + $0x268] sm:$0xff]
    %v406 = vld [vmem:[#allocation8 + $0x270] sm:$0xff]
    %v407 = vld [vmem:[#allocation8 + $0x278] sm:$0xff]
    %v408 = vld [vmem:[#allocation8 + $0x280] sm:$0xf]
    %v409 = vld [vmem:[#allocation8 + $0x284] sm:$0xff]
    %v410 = vld [vmem:[#allocation8 + $0x28c] sm:$0xff]
    %v411 = vld [vmem:[#allocation8 + $0x294] sm:$0xff]
    %v412 = vld [vmem:[#allocation8 + $0x29c] sm:$0xf]
    %v413 = vld [vmem:[#allocation8 + $0x2a0] sm:$0xff]
    %v414 = vld [vmem:[#allocation8 + $0x2a8] sm:$0xff]
    %v415 = vld [vmem:[#allocation8 + $0x2b0] sm:$0xff]
    %v416 = vld [vmem:[#allocation8 + $0x2b8] sm:$0xf]
    %v417 = vld [vmem:[#allocation8 + $0x2bc] sm:$0xff]
    %v418 = vld [vmem:[#allocation8 + $0x2c4] sm:$0xff]
    %v419 = vld [vmem:[#allocation8 + $0x2cc] sm:$0xff]
    %v420 = vld [vmem:[#allocation8 + $0x2d4] sm:$0xf]
    %v421 = vld [vmem:[#allocation8 + $0x2d8] sm:$0xff]
    %v422 = vld [vmem:[#allocation8 + $0x2e0] sm:$0xff]
    %v423 = vld [vmem:[#allocation8 + $0x2e8] sm:$0xff]
    %v424 = vld [vmem:[#allocation8 + $0x2f0] sm:$0xf]
    %v425 = vld [vmem:[#allocation8 + $0x2f4] sm:$0xff]
    %v426 = vld [vmem:[#allocation8 + $0x2fc] sm:$0xff]
    %v427 = vld [vmem:[#allocation8 + $0x304] sm:$0xff]
    %v428 = vld [vmem:[#allocation8 + $0x30c] sm:$0xf]
    %v429 = vld [vmem:[#allocation8 + $0x310] sm:$0xff]
    %v430 = vld [vmem:[#allocation8 + $0x318] sm:$0xff]
    %v431 = vld [vmem:[#allocation8 + $0x320] sm:$0xff]
    %v432 = vld [vmem:[#allocation8 + $0x328] sm:$0xf]
    %v433 = vld [vmem:[#allocation8 + $0x32c] sm:$0xff]
    %v434 = vld [vmem:[#allocation8 + $0x334] sm:$0xff]
    %v435 = vld [vmem:[#allocation8 + $0x33c] sm:$0xff]
    %v436 = vld [vmem:[#allocation8 + $0x344] sm:$0xf]
    %v437 = vld [vmem:[#allocation8 + $0x348] sm:$0xff]
    %v438 = vld [vmem:[#allocation8 + $0x350] sm:$0xff]
    %v439 = vld [vmem:[#allocation8 + $0x358] sm:$0xff]
    %v440 = vld [vmem:[#allocation8 + $0x360] sm:$0xf]
    %v441 = vld [vmem:[#allocation8 + $0x364] sm:$0xff]
    %v442 = vld [vmem:[#allocation8 + $0x36c] sm:$0xff]
    %v443 = vld [vmem:[#allocation8 + $0x374] sm:$0xff]
    %v444 = vld [vmem:[#allocation8 + $0x37c] sm:$0xf]
    %v445 = vld [vmem:[#allocation10] sm:$0xff]
    %v447 = vperm.slane %v445, 0
    %v448 = vperm.slane %v445, 1
    %v449 = vperm.slane %v445, 2
    %v450 = vperm.slane %v445, 3
    %v451 = vperm.slane %v445, 4
    %v452 = vperm.slane %v445, 5
    %v453 = vperm.slane %v445, 6
    %v589 = vunpack.c.l.b16 %v317
    %v590 = vunpack.c.h.b16 %v317
    %v591 = vunpack.c.l.b16 %v318
    %v592 = vunpack.c.h.b16 %v318
    %v593 = vunpack.c.l.b16 %v319
    %v594 = vunpack.c.h.b16 %v319
    %v595 = vunpack.c.l.b16 %v320
    %v596 = vunpack.c.l.b16 %v321
    %v597 = vunpack.c.h.b16 %v321
    %v598 = vunpack.c.l.b16 %v322
    %v599 = vunpack.c.h.b16 %v322
    %v600 = vunpack.c.l.b16 %v323
    %v601 = vunpack.c.h.b16 %v323
    %v602 = vunpack.c.l.b16 %v324
    %v603 = vunpack.c.l.b16 %v325
    %v604 = vunpack.c.h.b16 %v325
    %v605 = vunpack.c.l.b16 %v326
    %v606 = vunpack.c.h.b16 %v326
    %v607 = vunpack.c.l.b16 %v327
    %v608 = vunpack.c.h.b16 %v327
    %v609 = vunpack.c.l.b16 %v328
    %v610 = vunpack.c.l.b16 %v329
    %v611 = vunpack.c.h.b16 %v329
    %v612 = vunpack.c.l.b16 %v330
    %v613 = vunpack.c.h.b16 %v330
    %v614 = vunpack.c.l.b16 %v331
    %v615 = vunpack.c.h.b16 %v331
    %v616 = vunpack.c.l.b16 %v332
    %v617 = vunpack.c.l.b16 %v333
    %v618 = vunpack.c.h.b16 %v333
    %v619 = vunpack.c.l.b16 %v334
    %v620 = vunpack.c.h.b16 %v334
    %v621 = vunpack.c.l.b16 %v335
    %v622 = vunpack.c.h.b16 %v335
    %v623 = vunpack.c.l.b16 %v336
    %v624 = vunpack.c.l.b16 %v337
    %v625 = vunpack.c.h.b16 %v337
    %v626 = vunpack.c.l.b16 %v338
    %v627 = vunpack.c.h.b16 %v338
    %v628 = vunpack.c.l.b16 %v339
    %v629 = vunpack.c.h.b16 %v339
    %v630 = vunpack.c.l.b16 %v340
    %v631 = vunpack.c.l.b16 %v341
    %v632 = vunpack.c.h.b16 %v341
    %v633 = vunpack.c.l.b16 %v342
    %v634 = vunpack.c.h.b16 %v342
    %v635 = vunpack.c.l.b16 %v343
    %v636 = vunpack.c.h.b16 %v343
    %v637 = vunpack.c.l.b16 %v344
    %v638 = vunpack.c.l.b16 %v345
    %v639 = vunpack.c.h.b16 %v345
    %v640 = vunpack.c.l.b16 %v346
    %v641 = vunpack.c.h.b16 %v346
    %v642 = vunpack.c.l.b16 %v347
    %v643 = vunpack.c.h.b16 %v347
    %v644 = vunpack.c.l.b16 %v348
    %v645 = vunpack.c.l.b16 %v349
    %v646 = vunpack.c.h.b16 %v349
    %v647 = vunpack.c.l.b16 %v350
    %v648 = vunpack.c.h.b16 %v350
    %v649 = vunpack.c.l.b16 %v351
    %v650 = vunpack.c.h.b16 %v351
    %v651 = vunpack.c.l.b16 %v352
    %v652 = vunpack.c.l.b16 %v353
    %v653 = vunpack.c.h.b16 %v353
    %v654 = vunpack.c.l.b16 %v354
    %v655 = vunpack.c.h.b16 %v354
    %v656 = vunpack.c.l.b16 %v355
    %v657 = vunpack.c.h.b16 %v355
    %v658 = vunpack.c.l.b16 %v356
    %v659 = vunpack.c.l.b16 %v357
    %v660 = vunpack.c.h.b16 %v357
    %v661 = vunpack.c.l.b16 %v358
    %v662 = vunpack.c.h.b16 %v358
    %v663 = vunpack.c.l.b16 %v359
    %v664 = vunpack.c.h.b16 %v359
    %v665 = vunpack.c.l.b16 %v360
    %v666 = vunpack.c.l.b16 %v361
    %v667 = vunpack.c.h.b16 %v361
    %v668 = vunpack.c.l.b16 %v362
    %v669 = vunpack.c.h.b16 %v362
    %v670 = vunpack.c.l.b16 %v363
    %v671 = vunpack.c.h.b16 %v363
    %v672 = vunpack.c.l.b16 %v364
    %v673 = vunpack.c.l.b16 %v365
    %v674 = vunpack.c.h.b16 %v365
    %v675 = vunpack.c.l.b16 %v366
    %v676 = vunpack.c.h.b16 %v366
    %v677 = vunpack.c.l.b16 %v367
    %v678 = vunpack.c.h.b16 %v367
    %v679 = vunpack.c.l.b16 %v368
    %v680 = vunpack.c.l.b16 %v369
    %v681 = vunpack.c.h.b16 %v369
    %v682 = vunpack.c.l.b16 %v370
    %v683 = vunpack.c.h.b16 %v370
    %v684 = vunpack.c.l.b16 %v371
    %v685 = vunpack.c.h.b16 %v371
    %v686 = vunpack.c.l.b16 %v372
    %v687 = vunpack.c.l.b16 %v373
    %v688 = vunpack.c.h.b16 %v373
    %v689 = vunpack.c.l.b16 %v374
    %v690 = vunpack.c.h.b16 %v374
    %v691 = vunpack.c.l.b16 %v375
    %v692 = vunpack.c.h.b16 %v375
    %v693 = vunpack.c.l.b16 %v376
    %v694 = vunpack.c.l.b16 %v377
    %v695 = vunpack.c.h.b16 %v377
    %v696 = vunpack.c.l.b16 %v378
    %v697 = vunpack.c.h.b16 %v378
    %v698 = vunpack.c.l.b16 %v379
    %v699 = vunpack.c.h.b16 %v379
    %v700 = vunpack.c.l.b16 %v380
    %v701 = vunpack.c.l.b16 %v381
    %v702 = vunpack.c.h.b16 %v381
    %v703 = vunpack.c.l.b16 %v382
    %v704 = vunpack.c.h.b16 %v382
    %v705 = vunpack.c.l.b16 %v383
    %v706 = vunpack.c.h.b16 %v383
    %v707 = vunpack.c.l.b16 %v384
    %v708 = vunpack.c.l.b16 %v385
    %v709 = vunpack.c.h.b16 %v385
    %v710 = vunpack.c.l.b16 %v386
    %v711 = vunpack.c.h.b16 %v386
    %v712 = vunpack.c.l.b16 %v387
    %v713 = vunpack.c.h.b16 %v387
    %v714 = vunpack.c.l.b16 %v388
    %v715 = vunpack.c.l.b16 %v389
    %v716 = vunpack.c.h.b16 %v389
    %v717 = vunpack.c.l.b16 %v390
    %v718 = vunpack.c.h.b16 %v390
    %v719 = vunpack.c.l.b16 %v391
    %v720 = vunpack.c.h.b16 %v391
    %v721 = vunpack.c.l.b16 %v392
    %v722 = vunpack.c.l.b16 %v393
    %v723 = vunpack.c.h.b16 %v393
    %v724 = vunpack.c.l.b16 %v394
    %v725 = vunpack.c.h.b16 %v394
    %v726 = vunpack.c.l.b16 %v395
    %v727 = vunpack.c.h.b16 %v395
    %v728 = vunpack.c.l.b16 %v396
    %v729 = vunpack.c.l.b16 %v397
    %v730 = vunpack.c.h.b16 %v397
    %v731 = vunpack.c.l.b16 %v398
    %v732 = vunpack.c.h.b16 %v398
    %v733 = vunpack.c.l.b16 %v399
    %v734 = vunpack.c.h.b16 %v399
    %v735 = vunpack.c.l.b16 %v400
    %v736 = vunpack.c.l.b16 %v401
    %v737 = vunpack.c.h.b16 %v401
    %v738 = vunpack.c.l.b16 %v402
    %v739 = vunpack.c.h.b16 %v402
    %v740 = vunpack.c.l.b16 %v403
    %v741 = vunpack.c.h.b16 %v403
    %v742 = vunpack.c.l.b16 %v404
    %v743 = vunpack.c.l.b16 %v405
    %v744 = vunpack.c.h.b16 %v405
    %v745 = vunpack.c.l.b16 %v406
    %v746 = vunpack.c.h.b16 %v406
    %v747 = vunpack.c.l.b16 %v407
    %v748 = vunpack.c.h.b16 %v407
    %v749 = vunpack.c.l.b16 %v408
    %v750 = vunpack.c.l.b16 %v409
    %v751 = vunpack.c.h.b16 %v409
    %v752 = vunpack.c.l.b16 %v410
    %v753 = vunpack.c.h.b16 %v410
    %v754 = vunpack.c.l.b16 %v411
    %v755 = vunpack.c.h.b16 %v411
    %v756 = vunpack.c.l.b16 %v412
    %v757 = vunpack.c.l.b16 %v413
    %v758 = vunpack.c.h.b16 %v413
    %v759 = vunpack.c.l.b16 %v414
    %v760 = vunpack.c.h.b16 %v414
    %v761 = vunpack.c.l.b16 %v415
    %v762 = vunpack.c.h.b16 %v415
    %v763 = vunpack.c.l.b16 %v416
    %v764 = vunpack.c.l.b16 %v417
    %v765 = vunpack.c.h.b16 %v417
    %v766 = vunpack.c.l.b16 %v418
    %v767 = vunpack.c.h.b16 %v418
    %v768 = vunpack.c.l.b16 %v419
    %v769 = vunpack.c.h.b16 %v419
    %v770 = vunpack.c.l.b16 %v420
    %v771 = vunpack.c.l.b16 %v421
    %v772 = vunpack.c.h.b16 %v421
    %v773 = vunpack.c.l.b16 %v422
    %v774 = vunpack.c.h.b16 %v422
    %v775 = vunpack.c.l.b16 %v423
    %v776 = vunpack.c.h.b16 %v423
    %v777 = vunpack.c.l.b16 %v424
    %v778 = vunpack.c.l.b16 %v425
    %v779 = vunpack.c.h.b16 %v425
    %v780 = vunpack.c.l.b16 %v426
    %v781 = vunpack.c.h.b16 %v426
    %v782 = vunpack.c.l.b16 %v427
    %v783 = vunpack.c.h.b16 %v427
    %v784 = vunpack.c.l.b16 %v428
    %v785 = vunpack.c.l.b16 %v429
    %v786 = vunpack.c.h.b16 %v429
    %v787 = vunpack.c.l.b16 %v430
    %v788 = vunpack.c.h.b16 %v430
    %v789 = vunpack.c.l.b16 %v431
    %v790 = vunpack.c.h.b16 %v431
    %v791 = vunpack.c.l.b16 %v432
    %v792 = vunpack.c.l.b16 %v433
    %v793 = vunpack.c.h.b16 %v433
    %v794 = vunpack.c.l.b16 %v434
    %v795 = vunpack.c.h.b16 %v434
    %v796 = vunpack.c.l.b16 %v435
    %v797 = vunpack.c.h.b16 %v435
    %v798 = vunpack.c.l.b16 %v436
    %v799 = vunpack.c.l.b16 %v437
    %v800 = vunpack.c.h.b16 %v437
    %v801 = vunpack.c.l.b16 %v438
    %v802 = vunpack.c.h.b16 %v438
    %v803 = vunpack.c.l.b16 %v439
    %v804 = vunpack.c.h.b16 %v439
    %v805 = vunpack.c.l.b16 %v440
    %v806 = vunpack.c.l.b16 %v441
    %v807 = vunpack.c.h.b16 %v441
    %v808 = vunpack.c.l.b16 %v442
    %v809 = vunpack.c.h.b16 %v442
    %v810 = vunpack.c.l.b16 %v443
    %v811 = vunpack.c.h.b16 %v443
    %v812 = vunpack.c.l.b16 %v444
    %v813 = vpack.c.b16 %v596, %v589
    %v814 = vpack.c.b16 %v597, %v590
    %v815 = vpack.c.b16 %v598, %v591
    %v816 = vpack.c.b16 %v599, %v592
    %v817 = vpack.c.b16 %v600, %v593
    %v818 = vpack.c.b16 %v601, %v594
    %v819 = vpack.c.b16 %v602, %v595
    %v820 = vpack.c.b16 %v610, %v603
    %v821 = vpack.c.b16 %v611, %v604
    %v822 = vpack.c.b16 %v612, %v605
    %v823 = vpack.c.b16 %v613, %v606
    %v824 = vpack.c.b16 %v614, %v607
    %v825 = vpack.c.b16 %v615, %v608
    %v826 = vpack.c.b16 %v616, %v609
    %v827 = vpack.c.b16 %v624, %v617
    %v828 = vpack.c.b16 %v625, %v618
    %v829 = vpack.c.b16 %v626, %v619
    %v830 = vpack.c.b16 %v627, %v620
    %v831 = vpack.c.b16 %v628, %v621
    %v832 = vpack.c.b16 %v629, %v622
    %v833 = vpack.c.b16 %v630, %v623
    %v834 = vpack.c.b16 %v638, %v631
    %v835 = vpack.c.b16 %v639, %v632
    %v836 = vpack.c.b16 %v640, %v633
    %v837 = vpack.c.b16 %v641, %v634
    %v838 = vpack.c.b16 %v642, %v635
    %v839 = vpack.c.b16 %v643, %v636
    %v840 = vpack.c.b16 %v644, %v637
    %v841 = vpack.c.b16 %v652, %v645
    %v842 = vpack.c.b16 %v653, %v646
    %v843 = vpack.c.b16 %v654, %v647
    %v844 = vpack.c.b16 %v655, %v648
    %v845 = vpack.c.b16 %v656, %v649
    %v846 = vpack.c.b16 %v657, %v650
    %v847 = vpack.c.b16 %v658, %v651
    %v848 = vpack.c.b16 %v666, %v659
    %v849 = vpack.c.b16 %v667, %v660
    %v850 = vpack.c.b16 %v668, %v661
    %v851 = vpack.c.b16 %v669, %v662
    %v852 = vpack.c.b16 %v670, %v663
    %v853 = vpack.c.b16 %v671, %v664
    %v854 = vpack.c.b16 %v672, %v665
    %v855 = vpack.c.b16 %v680, %v673
    %v856 = vpack.c.b16 %v681, %v674
    %v857 = vpack.c.b16 %v682, %v675
    %v858 = vpack.c.b16 %v683, %v676
    %v859 = vpack.c.b16 %v684, %v677
    %v860 = vpack.c.b16 %v685, %v678
    %v861 = vpack.c.b16 %v686, %v679
    %v862 = vpack.c.b16 %v694, %v687
    %v863 = vpack.c.b16 %v695, %v688
    %v864 = vpack.c.b16 %v696, %v689
    %v865 = vpack.c.b16 %v697, %v690
    %v866 = vpack.c.b16 %v698, %v691
    %v867 = vpack.c.b16 %v699, %v692
    %v868 = vpack.c.b16 %v700, %v693
    %v869 = vpack.c.b16 %v708, %v701
    %v870 = vpack.c.b16 %v709, %v702
    %v871 = vpack.c.b16 %v710, %v703
    %v872 = vpack.c.b16 %v711, %v704
    %v873 = vpack.c.b16 %v712, %v705
    %v874 = vpack.c.b16 %v713, %v706
    %v875 = vpack.c.b16 %v714, %v707
    %v876 = vpack.c.b16 %v722, %v715
    %v877 = vpack.c.b16 %v723, %v716
    %v878 = vpack.c.b16 %v724, %v717
    %v879 = vpack.c.b16 %v725, %v718
    %v880 = vpack.c.b16 %v726, %v719
    %v881 = vpack.c.b16 %v727, %v720
    %v882 = vpack.c.b16 %v728, %v721
    %v883 = vpack.c.b16 %v736, %v729
    %v884 = vpack.c.b16 %v737, %v730
    %v885 = vpack.c.b16 %v738, %v731
    %v886 = vpack.c.b16 %v739, %v732
    %v887 = vpack.c.b16 %v740, %v733
    %v888 = vpack.c.b16 %v741, %v734
    %v889 = vpack.c.b16 %v742, %v735
    %v890 = vpack.c.b16 %v750, %v743
    %v891 = vpack.c.b16 %v751, %v744
    %v892 = vpack.c.b16 %v752, %v745
    %v893 = vpack.c.b16 %v753, %v746
    %v894 = vpack.c.b16 %v754, %v747
    %v895 = vpack.c.b16 %v755, %v748
    %v896 = vpack.c.b16 %v756, %v749
    %v897 = vpack.c.b16 %v764, %v757
    %v898 = vpack.c.b16 %v765, %v758
    %v899 = vpack.c.b16 %v766, %v759
    %v900 = vpack.c.b16 %v767, %v760
    %v901 = vpack.c.b16 %v768, %v761
    %v902 = vpack.c.b16 %v769, %v762
    %v903 = vpack.c.b16 %v770, %v763
    %v904 = vpack.c.b16 %v778, %v771
    %v905 = vpack.c.b16 %v779, %v772
    %v906 = vpack.c.b16 %v780, %v773
    %v907 = vpack.c.b16 %v781, %v774
    %v908 = vpack.c.b16 %v782, %v775
    %v909 = vpack.c.b16 %v783, %v776
    %v910 = vpack.c.b16 %v784, %v777
    %v911 = vpack.c.b16 %v792, %v785
    %v912 = vpack.c.b16 %v793, %v786
    %v913 = vpack.c.b16 %v794, %v787
    %v914 = vpack.c.b16 %v795, %v788
    %v915 = vpack.c.b16 %v796, %v789
    %v916 = vpack.c.b16 %v797, %v790
    %v917 = vpack.c.b16 %v798, %v791
    %v918 = vpack.c.b16 %v806, %v799
    %v919 = vpack.c.b16 %v807, %v800
    %v920 = vpack.c.b16 %v808, %v801
    %v921 = vpack.c.b16 %v809, %v802
    %v922 = vpack.c.b16 %v810, %v803
    %v923 = vpack.c.b16 %v811, %v804
    %v924 = vpack.c.b16 %v812, %v805
    %1037 = vmatpush.bf16.msra.mxu0 %v862
    %1038 = vmatpush.bf16.msra.mxu0 %v855
    %1039 = vmatpush.bf16.msra.mxu0 %v848
    %1040 = vmatpush.bf16.msra.mxu0 %v841
    %1041 = vmatpush.bf16.msra.mxu0 %v834
    %1042 = vmatpush.bf16.msra.mxu0 %v827
    %1043 = vmatpush.bf16.msra.mxu0 %v820
    %1044 = vmatpush.bf16.msra.mxu0 %v813
    %1045 = vmatmul.bf16.gmra.mxu0 %v315
    %v1046 = vpop.f32.mrf.mxu0
    %v1047 = vadd.f32 %v447, %v1046
    %v1048 = vpop.f32.mrf.mxu0
    %1049 = vdwg.mxu0
    %1050 = vmatpush.bf16.msra.mxu0 %v918
    %1051 = vmatpush.bf16.msra.mxu0 %v911
    %1052 = vmatpush.bf16.msra.mxu0 %v904
    %1053 = vmatpush.bf16.msra.mxu0 %v897
    %1054 = vmatpush.bf16.msra.mxu0 %v890
    %1055 = vmatpush.bf16.msra.mxu0 %v883
    %1056 = vmatpush.bf16.msra.mxu0 %v876
    %1057 = vmatpush.bf16.msra.mxu0 %v869
    %1058 = vmatmul.bf16.gmra.mxu0 %v316
    %v1059 = vpop.f32.mrf.mxu0
    %v1060 = vadd.f32 %v1047, %v1059
    %v1061 = vpop.f32.mrf.mxu0
    %1062 = vdwg.mxu0
    %1063 = vmatpush.bf16.msra.mxu0 %v863
    %1064 = vmatpush.bf16.msra.mxu0 %v856
    %1065 = vmatpush.bf16.msra.mxu0 %v849
    %1066 = vmatpush.bf16.msra.mxu0 %v842
    %1067 = vmatpush.bf16.msra.mxu0 %v835
    %1068 = vmatpush.bf16.msra.mxu0 %v828
    %1069 = vmatpush.bf16.msra.mxu0 %v821
    %1070 = vmatpush.bf16.msra.mxu0 %v814
    %1071 = vmatmul.bf16.gmra.mxu0 %v315
    %v1072 = vpop.f32.mrf.mxu0
    %v1073 = vadd.f32 %v448, %v1072
    %v1074 = vpop.f32.mrf.mxu0
    %1075 = vdwg.mxu0
    %1076 = vmatpush.bf16.msra.mxu0 %v919
    %1077 = vmatpush.bf16.msra.mxu0 %v912
    %1078 = vmatpush.bf16.msra.mxu0 %v905
    %1079 = vmatpush.bf16.msra.mxu0 %v898
    %1080 = vmatpush.bf16.msra.mxu0 %v891
    %1081 = vmatpush.bf16.msra.mxu0 %v884
    %1082 = vmatpush.bf16.msra.mxu0 %v877
    %1083 = vmatpush.bf16.msra.mxu0 %v870
    %1084 = vmatmul.bf16.gmra.mxu0 %v316
    %v1085 = vpop.f32.mrf.mxu0
    %v1086 = vadd.f32 %v1073, %v1085
    %v1087 = vpop.f32.mrf.mxu0
    %1088 = vdwg.mxu0
    %1089 = vmatpush.bf16.msra.mxu0 %v864
    %1090 = vmatpush.bf16.msra.mxu0 %v857
    %1091 = vmatpush.bf16.msra.mxu0 %v850
    %1092 = vmatpush.bf16.msra.mxu0 %v843
    %1093 = vmatpush.bf16.msra.mxu0 %v836
    %1094 = vmatpush.bf16.msra.mxu0 %v829
    %1095 = vmatpush.bf16.msra.mxu0 %v822
    %1096 = vmatpush.bf16.msra.mxu0 %v815
    %1097 = vmatmul.bf16.gmra.mxu0 %v315
    %v1098 = vpop.f32.mrf.mxu0
    %v1099 = vadd.f32 %v449, %v1098
    %v1100 = vpop.f32.mrf.mxu0
    %1101 = vdwg.mxu0
    %1102 = vmatpush.bf16.msra.mxu0 %v920
    %1103 = vmatpush.bf16.msra.mxu0 %v913
    %1104 = vmatpush.bf16.msra.mxu0 %v906
    %1105 = vmatpush.bf16.msra.mxu0 %v899
    %1106 = vmatpush.bf16.msra.mxu0 %v892
    %1107 = vmatpush.bf16.msra.mxu0 %v885
    %1108 = vmatpush.bf16.msra.mxu0 %v878
    %1109 = vmatpush.bf16.msra.mxu0 %v871
    %1110 = vmatmul.bf16.gmra.mxu0 %v316
    %v1111 = vpop.f32.mrf.mxu0
    %v1112 = vadd.f32 %v1099, %v1111
    %v1113 = vpop.f32.mrf.mxu0
    %1114 = vdwg.mxu0
    %1115 = vmatpush.bf16.msra.mxu0 %v865
    %1116 = vmatpush.bf16.msra.mxu0 %v858
    %1117 = vmatpush.bf16.msra.mxu0 %v851
    %1118 = vmatpush.bf16.msra.mxu0 %v844
    %1119 = vmatpush.bf16.msra.mxu0 %v837
    %1120 = vmatpush.bf16.msra.mxu0 %v830
    %1121 = vmatpush.bf16.msra.mxu0 %v823
    %1122 = vmatpush.bf16.msra.mxu0 %v816
    %1123 = vmatmul.bf16.gmra.mxu0 %v315
    %v1124 = vpop.f32.mrf.mxu0
    %v1125 = vadd.f32 %v450, %v1124
    %v1126 = vpop.f32.mrf.mxu0
    %1127 = vdwg.mxu0
    %1128 = vmatpush.bf16.msra.mxu0 %v921
    %1129 = vmatpush.bf16.msra.mxu0 %v914
    %1130 = vmatpush.bf16.msra.mxu0 %v907
    %1131 = vmatpush.bf16.msra.mxu0 %v900
    %1132 = vmatpush.bf16.msra.mxu0 %v893
    %1133 = vmatpush.bf16.msra.mxu0 %v886
    %1134 = vmatpush.bf16.msra.mxu0 %v879
    %1135 = vmatpush.bf16.msra.mxu0 %v872
    %1136 = vmatmul.bf16.gmra.mxu0 %v316
    %v1137 = vpop.f32.mrf.mxu0
    %v1138 = vadd.f32 %v1125, %v1137
    %v1139 = vpop.f32.mrf.mxu0
    %1140 = vdwg.mxu0
    %1141 = vmatpush.bf16.msra.mxu0 %v866
    %1142 = vmatpush.bf16.msra.mxu0 %v859
    %1143 = vmatpush.bf16.msra.mxu0 %v852
    %1144 = vmatpush.bf16.msra.mxu0 %v845
    %1145 = vmatpush.bf16.msra.mxu0 %v838
    %1146 = vmatpush.bf16.msra.mxu0 %v831
    %1147 = vmatpush.bf16.msra.mxu0 %v824
    %1148 = vmatpush.bf16.msra.mxu0 %v817
    %1149 = vmatmul.bf16.gmra.mxu0 %v315
    %v1150 = vpop.f32.mrf.mxu0
    %v1151 = vadd.f32 %v451, %v1150
    %v1152 = vpop.f32.mrf.mxu0
    %1153 = vdwg.mxu0
    %1154 = vmatpush.bf16.msra.mxu0 %v922
    %1155 = vmatpush.bf16.msra.mxu0 %v915
    %1156 = vmatpush.bf16.msra.mxu0 %v908
    %1157 = vmatpush.bf16.msra.mxu0 %v901
    %1158 = vmatpush.bf16.msra.mxu0 %v894
    %1159 = vmatpush.bf16.msra.mxu0 %v887
    %1160 = vmatpush.bf16.msra.mxu0 %v880
    %1161 = vmatpush.bf16.msra.mxu0 %v873
    %1162 = vmatmul.bf16.gmra.mxu0 %v316
    %v1163 = vpop.f32.mrf.mxu0
    %v1164 = vadd.f32 %v1151, %v1163
    %v1165 = vpop.f32.mrf.mxu0
    %1166 = vdwg.mxu0
    %1167 = vmatpush.bf16.msra.mxu0 %v867
    %1168 = vmatpush.bf16.msra.mxu0 %v860
    %1169 = vmatpush.bf16.msra.mxu0 %v853
    %1170 = vmatpush.bf16.msra.mxu0 %v846
    %1171 = vmatpush.bf16.msra.mxu0 %v839
    %1172 = vmatpush.bf16.msra.mxu0 %v832
    %1173 = vmatpush.bf16.msra.mxu0 %v825
    %1174 = vmatpush.bf16.msra.mxu0 %v818
    %1175 = vmatmul.bf16.gmra.mxu0 %v315
    %v1176 = vpop.f32.mrf.mxu0
    %v1177 = vadd.f32 %v452, %v1176
    %v1178 = vpop.f32.mrf.mxu0
    %1179 = vdwg.mxu0
    %1180 = vmatpush.bf16.msra.mxu0 %v923
    %1181 = vmatpush.bf16.msra.mxu0 %v916
    %1182 = vmatpush.bf16.msra.mxu0 %v909
    %1183 = vmatpush.bf16.msra.mxu0 %v902
    %1184 = vmatpush.bf16.msra.mxu0 %v895
    %1185 = vmatpush.bf16.msra.mxu0 %v888
    %1186 = vmatpush.bf16.msra.mxu0 %v881
    %1187 = vmatpush.bf16.msra.mxu0 %v874
    %1188 = vmatmul.bf16.gmra.mxu0 %v316
    %v1189 = vpop.f32.mrf.mxu0
    %v1190 = vadd.f32 %v1177, %v1189
    %v1191 = vpop.f32.mrf.mxu0
    %1192 = vdwg.mxu0
    %1193 = vmatpush.bf16.msra.mxu0 %v868
    %1194 = vmatpush.bf16.msra.mxu0 %v861
    %1195 = vmatpush.bf16.msra.mxu0 %v854
    %1196 = vmatpush.bf16.msra.mxu0 %v847
    %1197 = vmatpush.bf16.msra.mxu0 %v840
    %1198 = vmatpush.bf16.msra.mxu0 %v833
    %1199 = vmatpush.bf16.msra.mxu0 %v826
    %1200 = vmatpush.bf16.msra.mxu0 %v819
    %1201 = vmatmul.bf16.gmra.mxu0 %v315
    %v1202 = vpop.f32.mrf.mxu0
    %v1203 = vadd.f32 %v453, %v1202
    %v1204 = vpop.f32.mrf.mxu0
    %1205 = vdwg.mxu0
    %1206 = vmatpush.bf16.msra.mxu0 %v924
    %1207 = vmatpush.bf16.msra.mxu0 %v917
    %1208 = vmatpush.bf16.msra.mxu0 %v910
    %1209 = vmatpush.bf16.msra.mxu0 %v903
    %1210 = vmatpush.bf16.msra.mxu0 %v896
    %1211 = vmatpush.bf16.msra.mxu0 %v889
    %1212 = vmatpush.bf16.msra.mxu0 %v882
    %1213 = vmatpush.bf16.msra.mxu0 %v875
    %1214 = vmatmul.bf16.gmra.mxu0 %v316
    %v1215 = vpop.f32.mrf.mxu0
    %v1216 = vadd.f32 %v1203, %v1215
    %v1217 = vpop.f32.mrf.mxu0
    %1218 = vdwg.mxu0
    %1219 = vst [vmem:[#allocation11] sm:$0xff] %v1060
    %1220 = vst [vmem:[#allocation11 + $0x8] sm:$0xff] %v1086
    %1221 = vst [vmem:[#allocation11 + $0x10] sm:$0xff] %v1112
    %1222 = vst [vmem:[#allocation11 + $0x18] sm:$0xff] %v1138
    %1223 = vst [vmem:[#allocation11 + $0x20] sm:$0xff] %v1164
    %1224 = vst [vmem:[#allocation11 + $0x28] sm:$0xff] %v1190
    %1225 = vst [vmem:[#allocation11 + $0x30] sm:$0xff] %v1216
    // Predicated region
    $region50: #{tpu_custom_call.1} parent=1 // pred_check
      _
    $region51: #{tpu_custom_call.1} parent=1 // pred_check_branch
      %1227 = sbr.rel (0) target = $region53
    $region52: #{tpu_custom_call.1} parent=1 // pred_region
      %1229 = vsyncadd [#allocation4], 0
      %s1231 = sshll.u32 [#allocation11], 4
      %s1232 = int_to_ptr.vmem [resolvable:$true] %s1231
      %s1233 = sshll.u32 %s7, 4
      %s1234 = int_to_ptr.hbm [resolvable:$true] %s1233
      %1236 = dma.vmem_to_hbm [thread:$0]  %s1232, 896, %s1234, [#allocation4]
    $region53: #{tpu_custom_call.1} parent=1 // pred_fallthru
      _
    // Predicated region
    $region54: #{tpu_custom_call.1} parent=1 // pred_check
      _
    $region55: #{tpu_custom_call.1} parent=1 // pred_check_branch
      %1238 = sbr.rel (0) target = $region57
    $region56: #{tpu_custom_call.1} parent=1 // pred_region
      %1240 = dma.done [#allocation4], 896
    $region57: #{tpu_custom_call.1} parent=1 // pred_fallthru
      _
    %1241 = vsyncpa [#allocation3], 1
    %1242 = vsyncpa [#allocation6], 1
    %1243 = vsyncpa [#allocation9], 1
    %1244 = vsyncpa [#allocation4], 1

</llo_original>
